<compile_context>
chip_gen: v7x
topology: tpu7x:2x2x1
jax: 0.10.0
libtpu: 0.0.40
codegen_flags: <defaults>
</compile_context>

<pallas_src>
import jax
import jax.numpy as jnp
from jax.experimental import pallas as pl
from jax.experimental.pallas import tpu as pltpu


def _conv1x1_silu_kernel(w_ref, x_ref, o_ref):
    # w_ref: (1, 1) f32 scalar weight in SMEM
    # x_ref / o_ref: (block_rows, lane) tile in VMEM
    w = w_ref[0, 0]
    v = x_ref[...].astype(jnp.float32) * w          # 1x1 conv (1->1 ch, no bias)
    # SiLU(v) = v * sigmoid(v); sigmoid via a single EUP transcendental (tanh).
    s = 0.5 * (jnp.tanh(0.5 * v) + 1.0)
    o_ref[...] = (v * s).astype(o_ref.dtype)


def _num_tensorcores() -> int:
    """2 on v7x-class chips (megacore), 1 on v5e/v6e. Safe fallback: 1."""
    try:
        kind = jax.devices()[0].device_kind.lower()
    except Exception:
        return 1
    return 2 if ("v7" in kind or "7x" in kind) else 1


def conv1x1_silu(x_nchw: jax.Array, weight: jax.Array, *,
                 lane: int = 4096,
                 target_block_bytes: int = 2 << 20,
                 donate_input: bool = False) -> jax.Array:
    """x_nchw: (1, 1, H, W); weight: (1, 1, 1, 1)."""
    n, c, H, W = x_nchw.shape
    assert n == 1 and c == 1, "model is Conv2d(1, 1, 1, bias=False)"
    dtype = x_nchw.dtype
    itemsize = jnp.dtype(dtype).itemsize
    # Sublane packing per dtype width: f32 -> 8, bf16 -> 16, int8/fp8 -> 32.
    sub = {4: 8, 2: 16, 1: 32}.get(itemsize, 8)
    total = n * c * H * W

    w_smem = weight.reshape(1, 1).astype(jnp.float32)

    # ---- Lane-dense flat layout, padded so every store is unmasked ----
    lane_width = min(lane, ((total + 127) // 128) * 128)
    lane_width = max(128, (lane_width // 128) * 128)
    tile_elems = lane_width * sub                       # one full (sub, lane) tile
    padded_total = ((total + tile_elems - 1) // tile_elems) * tile_elems
    x_flat = x_nchw.reshape(-1)
    if padded_total != total:
        x_flat = jnp.pad(x_flat, (0, padded_total - total))
    rows = padded_total // lane_width                   # multiple of `sub` by construction
    x2d = x_flat.reshape(rows, lane_width)

    # ---- Block sizing: ~2 MiB blocks (4x double-buffered budget ~8 MiB,
    #      safe even under v5e's 16 MiB default scoped VMEM) ----
    row_bytes = lane_width * itemsize
    block_rows = max(sub, (target_block_bytes // row_bytes) // sub * sub)
    block_rows = min(block_rows, rows)
    block_rows = max(sub, (block_rows // sub) * sub)
    steps = pl.cdiv(rows, block_rows)

    # ---- Megacore (v7x) policy: >= 4 even steps for large arrays so each of
    #      the two TensorCores keeps double-buffer overlap. Single-TC chips
    #      (v5e/v6e) keep the fewest/largest blocks (grid is a serial loop). ----
    num_cores = _num_tensorcores()
    if num_cores >= 2 and rows * row_bytes >= (1 << 20):
        if steps < 4 or (steps % 2) != 0:
            tgt = max(4, steps + (steps % 2))
            block_rows = max(sub, (pl.cdiv(rows, tgt) // sub) * sub)
            steps = pl.cdiv(rows, block_rows)

    grid = (steps,)

    cost = pl.CostEstimate(
        flops=3 * padded_total,              # mul + tanh-form combine (approx)
        transcendentals=padded_total,        # one tanh per element
        bytes_accessed=2 * padded_total * itemsize,
    )

    extra_kwargs = {}
    if donate_input:
        # x2d is call-operand index 1 (after the SMEM weight); output index 0.
        extra_kwargs["input_output_aliases"] = {1: 0}

    out2d = pl.pallas_call(
        _conv1x1_silu_kernel,
        out_shape=jax.ShapeDtypeStruct(x2d.shape, dtype),
        grid_spec=pltpu.PrefetchScalarGridSpec(
            num_scalar_prefetch=0,
            grid=grid,
            in_specs=[
                pl.BlockSpec(memory_space=pltpu.MemorySpace.SMEM),   # scalar weight
                pl.BlockSpec((block_rows, lane_width), lambda i: (i, 0)),
            ],
            out_specs=pl.BlockSpec((block_rows, lane_width), lambda i: (i, 0)),
        ),
        compiler_params=pltpu.CompilerParams(
            dimension_semantics=("parallel",),
        ),
        cost_estimate=cost,
        **extra_kwargs,
    )(w_smem, x2d)

    out_flat = out2d.reshape(-1)
    if padded_total != total:
        out_flat = out_flat[:total]
    return out_flat.reshape(n, c, H, W)


def reference(x_nchw, weight):
    v = x_nchw * weight.reshape(())
    return v * jax.nn.sigmoid(v)


if __name__ == "__main__":
    key = jax.random.PRNGKey(0)
    kx, kw = jax.random.split(key)

    # Small shape consistent with the module (module uses 1x1x1024x1024 NCHW).
    H, W = 256, 256
    x1 = jax.random.normal(kx, (1, 1, H, W), dtype=jnp.float32)

    # Conv2d(1, 1, 1) weight shape: (out_c=1, in_c=1, kH=1, kW=1).
    weight = jax.random.uniform(kw, (1, 1, 1, 1), dtype=jnp.float32,
                                minval=-1.0, maxval=1.0)

    out = conv1x1_silu(x1, weight)
    out = jax.block_until_ready(out)

    ref = reference(x1, weight)
    assert out.shape == (1, 1, H, W)
    assert jnp.allclose(out, ref, atol=1e-5, rtol=1e-5), "mismatch vs reference"

    print("KERNEL_OK")
</pallas_src>

<mosaic_0001>
module attributes {stable_mosaic.version = 11 : i64} {
  func.func @_conv1x1_silu_kernel(%arg0: i32, %arg1: memref<1x1xf32, #tpu.memory_space<smem>>, %arg2: memref<16x4096xf32, #tpu.memory_space<vmem>>, %arg3: memref<16x4096xf32, #tpu.memory_space<vmem>>) attributes {dimension_semantics = [#tpu.dimension_semantics<parallel>], iteration_bounds = array<i64: 1>, scalar_prefetch = 0 : i64, scratch_operands = 0 : i64, tpu.core_type = #tpu.core_type<tc>, window_params = [{transform_indices = @transform_0, window_bounds = array<i64: 1, 1>}, {transform_indices = @transform_1, window_bounds = array<i64: 16, 4096>}, {transform_indices = @transform_2, window_bounds = array<i64: 16, 4096>}]} {
    %c0 = arith.constant 0 : index
    %c0_0 = arith.constant 0 : index
    %0 = memref.load %arg1[%c0, %c0_0] : memref<1x1xf32, #tpu.memory_space<smem>>
    %c0_1 = arith.constant 0 : index
    %c0_2 = arith.constant 0 : index
    %1 = vector.load %arg2[%c0_1, %c0_2] : memref<16x4096xf32, #tpu.memory_space<vmem>>, vector<16x4096xf32>
    %2 = vector.broadcast %0 : f32 to vector<16x4096xf32>
    %3 = arith.mulf %1, %2 : vector<16x4096xf32>
    %cst = arith.constant 5.000000e-01 : f32
    %4 = vector.broadcast %cst : f32 to vector<16x4096xf32>
    %5 = arith.mulf %4, %3 : vector<16x4096xf32>
    %6 = math.tanh %5 : vector<16x4096xf32>
    %cst_3 = arith.constant 1.000000e+00 : f32
    %7 = vector.broadcast %cst_3 : f32 to vector<16x4096xf32>
    %8 = arith.addf %6, %7 : vector<16x4096xf32>
    %cst_4 = arith.constant 5.000000e-01 : f32
    %9 = vector.broadcast %cst_4 : f32 to vector<16x4096xf32>
    %10 = arith.mulf %9, %8 : vector<16x4096xf32>
    %11 = arith.mulf %3, %10 : vector<16x4096xf32>
    %c0_5 = arith.constant 0 : index
    %c0_6 = arith.constant 0 : index
    %12 = vector.load %arg3[%c0_5, %c0_6] : memref<16x4096xf32, #tpu.memory_space<vmem>>, vector<16x4096xf32>
    tpu.vector_store %arg3[%c0_5, %c0_6], %11 {strides = array<i32>} : memref<16x4096xf32, #tpu.memory_space<vmem>>, vector<16x4096xf32>,
    return
  }
  func.func @transform_0(%arg0: i32) -> (i32, i32) {
    %c0_i32 = arith.constant 0 : i32
    %c0_i32_0 = arith.constant 0 : i32
    %c0_i32_1 = arith.constant 0 : i32
    return %c0_i32, %c0_i32_0 : i32, i32
  }
  func.func @transform_1(%arg0: i32) -> (i32, i32) {
    %c0_i32 = arith.constant 0 : i32
    %c0_i32_0 = arith.constant 0 : i32
    return %arg0, %c0_i32 : i32, i32
  }
  func.func @transform_2(%arg0: i32) -> (i32, i32) {
    %c0_i32 = arith.constant 0 : i32
    %c0_i32_0 = arith.constant 0 : i32
    return %arg0, %c0_i32 : i32, i32
  }
}

</mosaic_0001>

<llo_original>
// kernel: tpu_custom_call.1
$region0: #{tpu_custom_call.1}
  #allocation0 [shape = 'u32[]', space=smem, size = 0x4, offset = 0x4, fixed_abs, tag = 'smem constant byte address 0x4 - core index']
  #allocation1 [shape = 'u32[144,128]{1,0:T(1,128)}', space=vmem, size = 0x12000, scoped, tag = 'internal scratch']
  #allocation2 [shape = 'f32[1,1]{1,0:T(1,128)S(6)}', space=smem, size = 0x200, scoped, tag = 'scoped memory for tpu_custom_call.1']
  %s0 = inlined_call_operand.<no memory space> [shape: f32[1,1], index: 0, kind: input, shape index: {}]
  %s1 = inlined_call_operand.hbm [shape: f32[16,4096], index: 1, kind: input, shape index: {}]
  %s2 = inlined_call_operand.hbm [shape: f32[16,4096], index: 2, kind: output, shape index: {}]
  %s3 = sld [smem:[#allocation0]]
  $region22: #{tpu_custom_call.1} parent=0
    _
  %s5 = ssub.s32 1, %s3
  %s6 = scalar_select 0, %s5, %s3
  %7 = sst [smem:[#allocation2]] %s0
  $region1: #{tpu_custom_call.1} parent=0
    #allocation3 [shape = 'u8[262144]{0}', space=vmem, size = 0x40000, scoped, tag = 'input window, operand 1, single buffered']
    #allocation4 [shape = 's32[1]{0}', space=sflag, size = 0x4, scoped, tag = 'scoped memory for tpu_custom_call.1']
    #allocation5 [shape = 's32[1]{0}', space=sflag, size = 0x4, scoped, tag = 'scoped memory for tpu_custom_call.1']
    #allocation6 [shape = 'u8[262144]{0}', space=vmem, size = 0x40000, scoped, tag = 'output window, operand 0, single buffered']
    %8 = vsyncpa [#allocation4], 0
    %9 = vsyncpa [#allocation5], 0
    // Predicated region
    $region2: #{tpu_custom_call.1} parent=1 // pred_check
      _
    $region3: #{tpu_custom_call.1} parent=1 // pred_check_branch
      %11 = sbr.rel (0) target = $region5
    $region4: #{tpu_custom_call.1} parent=1 // pred_region
      _
    $region5: #{tpu_custom_call.1} parent=1 // pred_fallthru
      _
    // Predicated region
    $region6: #{tpu_custom_call.1} parent=1 // pred_check
      _
    $region7: #{tpu_custom_call.1} parent=1 // pred_check_branch
      %13 = sbr.rel (0) target = $region9
    $region8: #{tpu_custom_call.1} parent=1 // pred_region
      %s15 = ssub.s32 8192, 8192
      %16 = vsyncadd [#allocation4], %s15
      %s17 = sshll.u32 [#allocation3], 4
      %s18 = int_to_ptr.vmem [resolvable:$true] %s17
      %23 = dma.hbm_to_vmem [thread:$0]  %s1, 8192, %s18, [#allocation4], 4096, 4096, 256
    $region9: #{tpu_custom_call.1} parent=1 // pred_fallthru
      _
    // Predicated region
    $region10: #{tpu_custom_call.1} parent=1 // pred_check
      _
    $region11: #{tpu_custom_call.1} parent=1 // pred_check_branch
      %25 = sbr.rel (0) target = $region13
    $region12: #{tpu_custom_call.1} parent=1 // pred_region
      %26 = dma.done [#allocation4], 8192
    $region13: #{tpu_custom_call.1} parent=1 // pred_fallthru
      _
    %s27 = sld [smem:[#allocation2]]
    %v28 = vld [vmem:[#allocation3] sm:$0xff]
    %v29 = vld [vmem:[#allocation3 + $0x8] sm:$0xff]
    %v30 = vld [vmem:[#allocation3 + $0x10] sm:$0xff]
    %v31 = vld [vmem:[#allocation3 + $0x18] sm:$0xff]
    %v32 = vld [vmem:[#allocation3 + $0x20] sm:$0xff]
    %v33 = vld [vmem:[#allocation3 + $0x28] sm:$0xff]
    %v34 = vld [vmem:[#allocation3 + $0x30] sm:$0xff]
    %v35 = vld [vmem:[#allocation3 + $0x38] sm:$0xff]
    %v36 = vld [vmem:[#allocation3 + $0x40] sm:$0xff]
    %v37 = vld [vmem:[#allocation3 + $0x48] sm:$0xff]
    %v38 = vld [vmem:[#allocation3 + $0x50] sm:$0xff]
    %v39 = vld [vmem:[#allocation3 + $0x58] sm:$0xff]
    %v40 = vld [vmem:[#allocation3 + $0x60] sm:$0xff]
    %v41 = vld [vmem:[#allocation3 + $0x68] sm:$0xff]
    %v42 = vld [vmem:[#allocation3 + $0x70] sm:$0xff]
    %v43 = vld [vmem:[#allocation3 + $0x78] sm:$0xff]
    %v44 = vld [vmem:[#allocation3 + $0x80] sm:$0xff]
    %v45 = vld [vmem:[#allocation3 + $0x88] sm:$0xff]
    %v46 = vld [vmem:[#allocation3 + $0x90] sm:$0xff]
    %v47 = vld [vmem:[#allocation3 + $0x98] sm:$0xff]
    %v48 = vld [vmem:[#allocation3 + $0xa0] sm:$0xff]
    %v49 = vld [vmem:[#allocation3 + $0xa8] sm:$0xff]
    %v50 = vld [vmem:[#allocation3 + $0xb0] sm:$0xff]
    %v51 = vld [vmem:[#allocation3 + $0xb8] sm:$0xff]
    %v52 = vld [vmem:[#allocation3 + $0xc0] sm:$0xff]
    %v53 = vld [vmem:[#allocation3 + $0xc8] sm:$0xff]
    %v54 = vld [vmem:[#allocation3 + $0xd0] sm:$0xff]
    %v55 = vld [vmem:[#allocation3 + $0xd8] sm:$0xff]
    %v56 = vld [vmem:[#allocation3 + $0xe0] sm:$0xff]
    %v57 = vld [vmem:[#allocation3 + $0xe8] sm:$0xff]
    %v58 = vld [vmem:[#allocation3 + $0xf0] sm:$0xff]
    %v59 = vld [vmem:[#allocation3 + $0xf8] sm:$0xff]
    %v60 = vld [vmem:[#allocation3 + $0x100] sm:$0xff]
    %v61 = vld [vmem:[#allocation3 + $0x108] sm:$0xff]
    %v62 = vld [vmem:[#allocation3 + $0x110] sm:$0xff]
    %v63 = vld [vmem:[#allocation3 + $0x118] sm:$0xff]
    %v64 = vld [vmem:[#allocation3 + $0x120] sm:$0xff]
    %v65 = vld [vmem:[#allocation3 + $0x128] sm:$0xff]
    %v66 = vld [vmem:[#allocation3 + $0x130] sm:$0xff]
    %v67 = vld [vmem:[#allocation3 + $0x138] sm:$0xff]
    %v68 = vld [vmem:[#allocation3 + $0x140] sm:$0xff]
    %v69 = vld [vmem:[#allocation3 + $0x148] sm:$0xff]
    %v70 = vld [vmem:[#allocation3 + $0x150] sm:$0xff]
    %v71 = vld [vmem:[#allocation3 + $0x158] sm:$0xff]
    %v72 = vld [vmem:[#allocation3 + $0x160] sm:$0xff]
    %v73 = vld [vmem:[#allocation3 + $0x168] sm:$0xff]
    %v74 = vld [vmem:[#allocation3 + $0x170] sm:$0xff]
    %v75 = vld [vmem:[#allocation3 + $0x178] sm:$0xff]
    %v76 = vld [vmem:[#allocation3 + $0x180] sm:$0xff]
    %v77 = vld [vmem:[#allocation3 + $0x188] sm:$0xff]
    %v78 = vld [vmem:[#allocation3 + $0x190] sm:$0xff]
    %v79 = vld [vmem:[#allocation3 + $0x198] sm:$0xff]
    %v80 = vld [vmem:[#allocation3 + $0x1a0] sm:$0xff]
    %v81 = vld [vmem:[#allocation3 + $0x1a8] sm:$0xff]
    %v82 = vld [vmem:[#allocation3 + $0x1b0] sm:$0xff]
    %v83 = vld [vmem:[#allocation3 + $0x1b8] sm:$0xff]
    %v84 = vld [vmem:[#allocation3 + $0x1c0] sm:$0xff]
    %v85 = vld [vmem:[#allocation3 + $0x1c8] sm:$0xff]
    %v86 = vld [vmem:[#allocation3 + $0x1d0] sm:$0xff]
    %v87 = vld [vmem:[#allocation3 + $0x1d8] sm:$0xff]
    %v88 = vld [vmem:[#allocation3 + $0x1e0] sm:$0xff]
    %v89 = vld [vmem:[#allocation3 + $0x1e8] sm:$0xff]
    %v90 = vld [vmem:[#allocation3 + $0x1f0] sm:$0xff]
    %v91 = vld [vmem:[#allocation3 + $0x1f8] sm:$0xff]
    %v92 = vstv %s27
    %v93 = vmul.f32 %v28, %v92
    %v94 = vmul.f32 %v29, %v92
    %v95 = vmul.f32 %v30, %v92
    %v96 = vmul.f32 %v31, %v92
    %v97 = vmul.f32 %v32, %v92
    %v98 = vmul.f32 %v33, %v92
    %v99 = vmul.f32 %v34, %v92
    %v100 = vmul.f32 %v35, %v92
    %v101 = vmul.f32 %v36, %v92
    %v102 = vmul.f32 %v37, %v92
    %v103 = vmul.f32 %v38, %v92
    %v104 = vmul.f32 %v39, %v92
    %v105 = vmul.f32 %v40, %v92
    %v106 = vmul.f32 %v41, %v92
    %v107 = vmul.f32 %v42, %v92
    %v108 = vmul.f32 %v43, %v92
    %v109 = vmul.f32 %v44, %v92
    %v110 = vmul.f32 %v45, %v92
    %v111 = vmul.f32 %v46, %v92
    %v112 = vmul.f32 %v47, %v92
    %v113 = vmul.f32 %v48, %v92
    %v114 = vmul.f32 %v49, %v92
    %v115 = vmul.f32 %v50, %v92
    %v116 = vmul.f32 %v51, %v92
    %v117 = vmul.f32 %v52, %v92
    %v118 = vmul.f32 %v53, %v92
    %v119 = vmul.f32 %v54, %v92
    %v120 = vmul.f32 %v55, %v92
    %v121 = vmul.f32 %v56, %v92
    %v122 = vmul.f32 %v57, %v92
    %v123 = vmul.f32 %v58, %v92
    %v124 = vmul.f32 %v59, %v92
    %v125 = vmul.f32 %v60, %v92
    %v126 = vmul.f32 %v61, %v92
    %v127 = vmul.f32 %v62, %v92
    %v128 = vmul.f32 %v63, %v92
    %v129 = vmul.f32 %v64, %v92
    %v130 = vmul.f32 %v65, %v92
    %v131 = vmul.f32 %v66, %v92
    %v132 = vmul.f32 %v67, %v92
    %v133 = vmul.f32 %v68, %v92
    %v134 = vmul.f32 %v69, %v92
    %v135 = vmul.f32 %v70, %v92
    %v136 = vmul.f32 %v71, %v92
    %v137 = vmul.f32 %v72, %v92
    %v138 = vmul.f32 %v73, %v92
    %v139 = vmul.f32 %v74, %v92
    %v140 = vmul.f32 %v75, %v92
    %v141 = vmul.f32 %v76, %v92
    %v142 = vmul.f32 %v77, %v92
    %v143 = vmul.f32 %v78, %v92
    %v144 = vmul.f32 %v79, %v92
    %v145 = vmul.f32 %v80, %v92
    %v146 = vmul.f32 %v81, %v92
    %v147 = vmul.f32 %v82, %v92
    %v148 = vmul.f32 %v83, %v92
    %v149 = vmul.f32 %v84, %v92
    %v150 = vmul.f32 %v85, %v92
    %v151 = vmul.f32 %v86, %v92
    %v152 = vmul.f32 %v87, %v92
    %v153 = vmul.f32 %v88, %v92
    %v154 = vmul.f32 %v89, %v92
    %v155 = vmul.f32 %v90, %v92
    %v156 = vmul.f32 %v91, %v92
    %v157 = vmul.f32 %v93, 0.5
    %v158 = vmul.f32 %v94, 0.5
    %v159 = vmul.f32 %v95, 0.5
    %v160 = vmul.f32 %v96, 0.5
    %v161 = vmul.f32 %v97, 0.5
    %v162 = vmul.f32 %v98, 0.5
    %v163 = vmul.f32 %v99, 0.5
    %v164 = vmul.f32 %v100, 0.5
    %v165 = vmul.f32 %v101, 0.5
    %v166 = vmul.f32 %v102, 0.5
    %v167 = vmul.f32 %v103, 0.5
    %v168 = vmul.f32 %v104, 0.5
    %v169 = vmul.f32 %v105, 0.5
    %v170 = vmul.f32 %v106, 0.5
    %v171 = vmul.f32 %v107, 0.5
    %v172 = vmul.f32 %v108, 0.5
    %v173 = vmul.f32 %v109, 0.5
    %v174 = vmul.f32 %v110, 0.5
    %v175 = vmul.f32 %v111, 0.5
    %v176 = vmul.f32 %v112, 0.5
    %v177 = vmul.f32 %v113, 0.5
    %v178 = vmul.f32 %v114, 0.5
    %v179 = vmul.f32 %v115, 0.5
    %v180 = vmul.f32 %v116, 0.5
    %v181 = vmul.f32 %v117, 0.5
    %v182 = vmul.f32 %v118, 0.5
    %v183 = vmul.f32 %v119, 0.5
    %v184 = vmul.f32 %v120, 0.5
    %v185 = vmul.f32 %v121, 0.5
    %v186 = vmul.f32 %v122, 0.5
    %v187 = vmul.f32 %v123, 0.5
    %v188 = vmul.f32 %v124, 0.5
    %v189 = vmul.f32 %v125, 0.5
    %v190 = vmul.f32 %v126, 0.5
    %v191 = vmul.f32 %v127, 0.5
    %v192 = vmul.f32 %v128, 0.5
    %v193 = vmul.f32 %v129, 0.5
    %v194 = vmul.f32 %v130, 0.5
    %v195 = vmul.f32 %v131, 0.5
    %v196 = vmul.f32 %v132, 0.5
    %v197 = vmul.f32 %v133, 0.5
    %v198 = vmul.f32 %v134, 0.5
    %v199 = vmul.f32 %v135, 0.5
    %v200 = vmul.f32 %v136, 0.5
    %v201 = vmul.f32 %v137, 0.5
    %v202 = vmul.f32 %v138, 0.5
    %v203 = vmul.f32 %v139, 0.5
    %v204 = vmul.f32 %v140, 0.5
    %v205 = vmul.f32 %v141, 0.5
    %v206 = vmul.f32 %v142, 0.5
    %v207 = vmul.f32 %v143, 0.5
    %v208 = vmul.f32 %v144, 0.5
    %v209 = vmul.f32 %v145, 0.5
    %v210 = vmul.f32 %v146, 0.5
    %v211 = vmul.f32 %v147, 0.5
    %v212 = vmul.f32 %v148, 0.5
    %v213 = vmul.f32 %v149, 0.5
    %v214 = vmul.f32 %v150, 0.5
    %v215 = vmul.f32 %v151, 0.5
    %v216 = vmul.f32 %v152, 0.5
    %v217 = vmul.f32 %v153, 0.5
    %v218 = vmul.f32 %v154, 0.5
    %v219 = vmul.f32 %v155, 0.5
    %v220 = vmul.f32 %v156, 0.5
    %v221 = vtanh.pop %v157
    %v222 = vtanh.pop %v158
    %v223 = vtanh.pop %v159
    %v224 = vtanh.pop %v160
    %v225 = vtanh.pop %v161
    %v226 = vtanh.pop %v162
    %v227 = vtanh.pop %v163
    %v228 = vtanh.pop %v164
    %v229 = vtanh.pop %v165
    %v230 = vtanh.pop %v166
    %v231 = vtanh.pop %v167
    %v232 = vtanh.pop %v168
    %v233 = vtanh.pop %v169
    %v234 = vtanh.pop %v170
    %v235 = vtanh.pop %v171
    %v236 = vtanh.pop %v172
    %v237 = vtanh.pop %v173
    %v238 = vtanh.pop %v174
    %v239 = vtanh.pop %v175
    %v240 = vtanh.pop %v176
    %v241 = vtanh.pop %v177
    %v242 = vtanh.pop %v178
    %v243 = vtanh.pop %v179
    %v244 = vtanh.pop %v180
    %v245 = vtanh.pop %v181
    %v246 = vtanh.pop %v182
    %v247 = vtanh.pop %v183
    %v248 = vtanh.pop %v184
    %v249 = vtanh.pop %v185
    %v250 = vtanh.pop %v186
    %v251 = vtanh.pop %v187
    %v252 = vtanh.pop %v188
    %v253 = vtanh.pop %v189
    %v254 = vtanh.pop %v190
    %v255 = vtanh.pop %v191
    %v256 = vtanh.pop %v192
    %v257 = vtanh.pop %v193
    %v258 = vtanh.pop %v194
    %v259 = vtanh.pop %v195
    %v260 = vtanh.pop %v196
    %v261 = vtanh.pop %v197
    %v262 = vtanh.pop %v198
    %v263 = vtanh.pop %v199
    %v264 = vtanh.pop %v200
    %v265 = vtanh.pop %v201
    %v266 = vtanh.pop %v202
    %v267 = vtanh.pop %v203
    %v268 = vtanh.pop %v204
    %v269 = vtanh.pop %v205
    %v270 = vtanh.pop %v206
    %v271 = vtanh.pop %v207
    %v272 = vtanh.pop %v208
    %v273 = vtanh.pop %v209
    %v274 = vtanh.pop %v210
    %v275 = vtanh.pop %v211
    %v276 = vtanh.pop %v212
    %v277 = vtanh.pop %v213
    %v278 = vtanh.pop %v214
    %v279 = vtanh.pop %v215
    %v280 = vtanh.pop %v216
    %v281 = vtanh.pop %v217
    %v282 = vtanh.pop %v218
    %v283 = vtanh.pop %v219
    %v284 = vtanh.pop %v220
    %v285 = vadd.f32 %v221, 1.0
    %v286 = vadd.f32 %v222, 1.0
    %v287 = vadd.f32 %v223, 1.0
    %v288 = vadd.f32 %v224, 1.0
    %v289 = vadd.f32 %v225, 1.0
    %v290 = vadd.f32 %v226, 1.0
    %v291 = vadd.f32 %v227, 1.0
    %v292 = vadd.f32 %v228, 1.0
    %v293 = vadd.f32 %v229, 1.0
    %v294 = vadd.f32 %v230, 1.0
    %v295 = vadd.f32 %v231, 1.0
    %v296 = vadd.f32 %v232, 1.0
    %v297 = vadd.f32 %v233, 1.0
    %v298 = vadd.f32 %v234, 1.0
    %v299 = vadd.f32 %v235, 1.0
    %v300 = vadd.f32 %v236, 1.0
    %v301 = vadd.f32 %v237, 1.0
    %v302 = vadd.f32 %v238, 1.0
    %v303 = vadd.f32 %v239, 1.0
    %v304 = vadd.f32 %v240, 1.0
    %v305 = vadd.f32 %v241, 1.0
    %v306 = vadd.f32 %v242, 1.0
    %v307 = vadd.f32 %v243, 1.0
    %v308 = vadd.f32 %v244, 1.0
    %v309 = vadd.f32 %v245, 1.0
    %v310 = vadd.f32 %v246, 1.0
    %v311 = vadd.f32 %v247, 1.0
    %v312 = vadd.f32 %v248, 1.0
    %v313 = vadd.f32 %v249, 1.0
    %v314 = vadd.f32 %v250, 1.0
    %v315 = vadd.f32 %v251, 1.0
    %v316 = vadd.f32 %v252, 1.0
    %v317 = vadd.f32 %v253, 1.0
    %v318 = vadd.f32 %v254, 1.0
    %v319 = vadd.f32 %v255, 1.0
    %v320 = vadd.f32 %v256, 1.0
    %v321 = vadd.f32 %v257, 1.0
    %v322 = vadd.f32 %v258, 1.0
    %v323 = vadd.f32 %v259, 1.0
    %v324 = vadd.f32 %v260, 1.0
    %v325 = vadd.f32 %v261, 1.0
    %v326 = vadd.f32 %v262, 1.0
    %v327 = vadd.f32 %v263, 1.0
    %v328 = vadd.f32 %v264, 1.0
    %v329 = vadd.f32 %v265, 1.0
    %v330 = vadd.f32 %v266, 1.0
    %v331 = vadd.f32 %v267, 1.0
    %v332 = vadd.f32 %v268, 1.0
    %v333 = vadd.f32 %v269, 1.0
    %v334 = vadd.f32 %v270, 1.0
    %v335 = vadd.f32 %v271, 1.0
    %v336 = vadd.f32 %v272, 1.0
    %v337 = vadd.f32 %v273, 1.0
    %v338 = vadd.f32 %v274, 1.0
    %v339 = vadd.f32 %v275, 1.0
    %v340 = vadd.f32 %v276, 1.0
    %v341 = vadd.f32 %v277, 1.0
    %v342 = vadd.f32 %v278, 1.0
    %v343 = vadd.f32 %v279, 1.0
    %v344 = vadd.f32 %v280, 1.0
    %v345 = vadd.f32 %v281, 1.0
    %v346 = vadd.f32 %v282, 1.0
    %v347 = vadd.f32 %v283, 1.0
    %v348 = vadd.f32 %v284, 1.0
    %v349 = vmul.f32 %v285, 0.5
    %v350 = vmul.f32 %v286, 0.5
    %v351 = vmul.f32 %v287, 0.5
    %v352 = vmul.f32 %v288, 0.5
    %v353 = vmul.f32 %v289, 0.5
    %v354 = vmul.f32 %v290, 0.5
    %v355 = vmul.f32 %v291, 0.5
    %v356 = vmul.f32 %v292, 0.5
    %v357 = vmul.f32 %v293, 0.5
    %v358 = vmul.f32 %v294, 0.5
    %v359 = vmul.f32 %v295, 0.5
    %v360 = vmul.f32 %v296, 0.5
    %v361 = vmul.f32 %v297, 0.5
    %v362 = vmul.f32 %v298, 0.5
    %v363 = vmul.f32 %v299, 0.5
    %v364 = vmul.f32 %v300, 0.5
    %v365 = vmul.f32 %v301, 0.5
    %v366 = vmul.f32 %v302, 0.5
    %v367 = vmul.f32 %v303, 0.5
    %v368 = vmul.f32 %v304, 0.5
    %v369 = vmul.f32 %v305, 0.5
    %v370 = vmul.f32 %v306, 0.5
    %v371 = vmul.f32 %v307, 0.5
    %v372 = vmul.f32 %v308, 0.5
    %v373 = vmul.f32 %v309, 0.5
    %v374 = vmul.f32 %v310, 0.5
    %v375 = vmul.f32 %v311, 0.5
    %v376 = vmul.f32 %v312, 0.5
    %v377 = vmul.f32 %v313, 0.5
    %v378 = vmul.f32 %v314, 0.5
    %v379 = vmul.f32 %v315, 0.5
    %v380 = vmul.f32 %v316, 0.5
    %v381 = vmul.f32 %v317, 0.5
    %v382 = vmul.f32 %v318, 0.5
    %v383 = vmul.f32 %v319, 0.5
    %v384 = vmul.f32 %v320, 0.5
    %v385 = vmul.f32 %v321, 0.5
    %v386 = vmul.f32 %v322, 0.5
    %v387 = vmul.f32 %v323, 0.5
    %v388 = vmul.f32 %v324, 0.5
    %v389 = vmul.f32 %v325, 0.5
    %v390 = vmul.f32 %v326, 0.5
    %v391 = vmul.f32 %v327, 0.5
    %v392 = vmul.f32 %v328, 0.5
    %v393 = vmul.f32 %v329, 0.5
    %v394 = vmul.f32 %v330, 0.5
    %v395 = vmul.f32 %v331, 0.5
    %v396 = vmul.f32 %v332, 0.5
    %v397 = vmul.f32 %v333, 0.5
    %v398 = vmul.f32 %v334, 0.5
    %v399 = vmul.f32 %v335, 0.5
    %v400 = vmul.f32 %v336, 0.5
    %v401 = vmul.f32 %v337, 0.5
    %v402 = vmul.f32 %v338, 0.5
    %v403 = vmul.f32 %v339, 0.5
    %v404 = vmul.f32 %v340, 0.5
    %v405 = vmul.f32 %v341, 0.5
    %v406 = vmul.f32 %v342, 0.5
    %v407 = vmul.f32 %v343, 0.5
    %v408 = vmul.f32 %v344, 0.5
    %v409 = vmul.f32 %v345, 0.5
    %v410 = vmul.f32 %v346, 0.5
    %v411 = vmul.f32 %v347, 0.5
    %v412 = vmul.f32 %v348, 0.5
    %v413 = vmul.f32 %v93, %v349
    %v414 = vmul.f32 %v94, %v350
    %v415 = vmul.f32 %v95, %v351
    %v416 = vmul.f32 %v96, %v352
    %v417 = vmul.f32 %v97, %v353
    %v418 = vmul.f32 %v98, %v354
    %v419 = vmul.f32 %v99, %v355
    %v420 = vmul.f32 %v100, %v356
    %v421 = vmul.f32 %v101, %v357
    %v422 = vmul.f32 %v102, %v358
    %v423 = vmul.f32 %v103, %v359
    %v424 = vmul.f32 %v104, %v360
    %v425 = vmul.f32 %v105, %v361
    %v426 = vmul.f32 %v106, %v362
    %v427 = vmul.f32 %v107, %v363
    %v428 = vmul.f32 %v108, %v364
    %v429 = vmul.f32 %v109, %v365
    %v430 = vmul.f32 %v110, %v366
    %v431 = vmul.f32 %v111, %v367
    %v432 = vmul.f32 %v112, %v368
    %v433 = vmul.f32 %v113, %v369
    %v434 = vmul.f32 %v114, %v370
    %v435 = vmul.f32 %v115, %v371
    %v436 = vmul.f32 %v116, %v372
    %v437 = vmul.f32 %v117, %v373
    %v438 = vmul.f32 %v118, %v374
    %v439 = vmul.f32 %v119, %v375
    %v440 = vmul.f32 %v120, %v376
    %v441 = vmul.f32 %v121, %v377
    %v442 = vmul.f32 %v122, %v378
    %v443 = vmul.f32 %v123, %v379
    %v444 = vmul.f32 %v124, %v380
    %v445 = vmul.f32 %v125, %v381
    %v446 = vmul.f32 %v126, %v382
    %v447 = vmul.f32 %v127, %v383
    %v448 = vmul.f32 %v128, %v384
    %v449 = vmul.f32 %v129, %v385
    %v450 = vmul.f32 %v130, %v386
    %v451 = vmul.f32 %v131, %v387
    %v452 = vmul.f32 %v132, %v388
    %v453 = vmul.f32 %v133, %v389
    %v454 = vmul.f32 %v134, %v390
    %v455 = vmul.f32 %v135, %v391
    %v456 = vmul.f32 %v136, %v392
    %v457 = vmul.f32 %v137, %v393
    %v458 = vmul.f32 %v138, %v394
    %v459 = vmul.f32 %v139, %v395
    %v460 = vmul.f32 %v140, %v396
    %v461 = vmul.f32 %v141, %v397
    %v462 = vmul.f32 %v142, %v398
    %v463 = vmul.f32 %v143, %v399
    %v464 = vmul.f32 %v144, %v400
    %v465 = vmul.f32 %v145, %v401
    %v466 = vmul.f32 %v146, %v402
    %v467 = vmul.f32 %v147, %v403
    %v468 = vmul.f32 %v148, %v404
    %v469 = vmul.f32 %v149, %v405
    %v470 = vmul.f32 %v150, %v406
    %v471 = vmul.f32 %v151, %v407
    %v472 = vmul.f32 %v152, %v408
    %v473 = vmul.f32 %v153, %v409
    %v474 = vmul.f32 %v154, %v410
    %v475 = vmul.f32 %v155, %v411
    %v476 = vmul.f32 %v156, %v412
    %477 = vst [vmem:[#allocation6] sm:$0xff] %v413
    %478 = vst [vmem:[#allocation6 + $0x8] sm:$0xff] %v414
    %479 = vst [vmem:[#allocation6 + $0x10] sm:$0xff] %v415
    %480 = vst [vmem:[#allocation6 + $0x18] sm:$0xff] %v416
    %481 = vst [vmem:[#allocation6 + $0x20] sm:$0xff] %v417
    %482 = vst [vmem:[#allocation6 + $0x28] sm:$0xff] %v418
    %483 = vst [vmem:[#allocation6 + $0x30] sm:$0xff] %v419
    %484 = vst [vmem:[#allocation6 + $0x38] sm:$0xff] %v420
    %485 = vst [vmem:[#allocation6 + $0x40] sm:$0xff] %v421
    %486 = vst [vmem:[#allocation6 + $0x48] sm:$0xff] %v422
    %487 = vst [vmem:[#allocation6 + $0x50] sm:$0xff] %v423
    %488 = vst [vmem:[#allocation6 + $0x58] sm:$0xff] %v424
    %489 = vst [vmem:[#allocation6 + $0x60] sm:$0xff] %v425
    %490 = vst [vmem:[#allocation6 + $0x68] sm:$0xff] %v426
    %491 = vst [vmem:[#allocation6 + $0x70] sm:$0xff] %v427
    %492 = vst [vmem:[#allocation6 + $0x78] sm:$0xff] %v428
    %493 = vst [vmem:[#allocation6 + $0x80] sm:$0xff] %v429
    %494 = vst [vmem:[#allocation6 + $0x88] sm:$0xff] %v430
    %495 = vst [vmem:[#allocation6 + $0x90] sm:$0xff] %v431
    %496 = vst [vmem:[#allocation6 + $0x98] sm:$0xff] %v432
    %497 = vst [vmem:[#allocation6 + $0xa0] sm:$0xff] %v433
    %498 = vst [vmem:[#allocation6 + $0xa8] sm:$0xff] %v434
    %499 = vst [vmem:[#allocation6 + $0xb0] sm:$0xff] %v435
    %500 = vst [vmem:[#allocation6 + $0xb8] sm:$0xff] %v436
    %501 = vst [vmem:[#allocation6 + $0xc0] sm:$0xff] %v437
    %502 = vst [vmem:[#allocation6 + $0xc8] sm:$0xff] %v438
    %503 = vst [vmem:[#allocation6 + $0xd0] sm:$0xff] %v439
    %504 = vst [vmem:[#allocation6 + $0xd8] sm:$0xff] %v440
    %505 = vst [vmem:[#allocation6 + $0xe0] sm:$0xff] %v441
    %506 = vst [vmem:[#allocation6 + $0xe8] sm:$0xff] %v442
    %507 = vst [vmem:[#allocation6 + $0xf0] sm:$0xff] %v443
    %508 = vst [vmem:[#allocation6 + $0xf8] sm:$0xff] %v444
    %509 = vst [vmem:[#allocation6 + $0x100] sm:$0xff] %v445
    %510 = vst [vmem:[#allocation6 + $0x108] sm:$0xff] %v446
    %511 = vst [vmem:[#allocation6 + $0x110] sm:$0xff] %v447
    %512 = vst [vmem:[#allocation6 + $0x118] sm:$0xff] %v448
    %513 = vst [vmem:[#allocation6 + $0x120] sm:$0xff] %v449
    %514 = vst [vmem:[#allocation6 + $0x128] sm:$0xff] %v450
    %515 = vst [vmem:[#allocation6 + $0x130] sm:$0xff] %v451
    %516 = vst [vmem:[#allocation6 + $0x138] sm:$0xff] %v452
    %517 = vst [vmem:[#allocation6 + $0x140] sm:$0xff] %v453
    %518 = vst [vmem:[#allocation6 + $0x148] sm:$0xff] %v454
    %519 = vst [vmem:[#allocation6 + $0x150] sm:$0xff] %v455
    %520 = vst [vmem:[#allocation6 + $0x158] sm:$0xff] %v456
    %521 = vst [vmem:[#allocation6 + $0x160] sm:$0xff] %v457
    %522 = vst [vmem:[#allocation6 + $0x168] sm:$0xff] %v458
    %523 = vst [vmem:[#allocation6 + $0x170] sm:$0xff] %v459
    %524 = vst [vmem:[#allocation6 + $0x178] sm:$0xff] %v460
    %525 = vst [vmem:[#allocation6 + $0x180] sm:$0xff] %v461
    %526 = vst [vmem:[#allocation6 + $0x188] sm:$0xff] %v462
    %527 = vst [vmem:[#allocation6 + $0x190] sm:$0xff] %v463
    %528 = vst [vmem:[#allocation6 + $0x198] sm:$0xff] %v464
    %529 = vst [vmem:[#allocation6 + $0x1a0] sm:$0xff] %v465
    %530 = vst [vmem:[#allocation6 + $0x1a8] sm:$0xff] %v466
    %531 = vst [vmem:[#allocation6 + $0x1b0] sm:$0xff] %v467
    %532 = vst [vmem:[#allocation6 + $0x1b8] sm:$0xff] %v468
    %533 = vst [vmem:[#allocation6 + $0x1c0] sm:$0xff] %v469
    %534 = vst [vmem:[#allocation6 + $0x1c8] sm:$0xff] %v470
    %535 = vst [vmem:[#allocation6 + $0x1d0] sm:$0xff] %v471
    %536 = vst [vmem:[#allocation6 + $0x1d8] sm:$0xff] %v472
    %537 = vst [vmem:[#allocation6 + $0x1e0] sm:$0xff] %v473
    %538 = vst [vmem:[#allocation6 + $0x1e8] sm:$0xff] %v474
    %539 = vst [vmem:[#allocation6 + $0x1f0] sm:$0xff] %v475
    %540 = vst [vmem:[#allocation6 + $0x1f8] sm:$0xff] %v476
    // Predicated region
    $region14: #{tpu_custom_call.1} parent=1 // pred_check
      _
    $region15: #{tpu_custom_call.1} parent=1 // pred_check_branch
      %542 = sbr.rel (0) target = $region17
    $region16: #{tpu_custom_call.1} parent=1 // pred_region
      %s544 = ssub.s32 8192, 8192
      %545 = vsyncadd [#allocation5], %s544
      %s546 = sshll.u32 [#allocation6], 4
      %s547 = int_to_ptr.vmem [resolvable:$true] %s546
      %552 = dma.vmem_to_hbm [thread:$0]  %s547, 8192, %s2, [#allocation5], 4096, 4096, 256
    $region17: #{tpu_custom_call.1} parent=1 // pred_fallthru
      _
    // Predicated region
    $region18: #{tpu_custom_call.1} parent=1 // pred_check
      _
    $region19: #{tpu_custom_call.1} parent=1 // pred_check_branch
      %554 = sbr.rel (0) target = $region21
    $region20: #{tpu_custom_call.1} parent=1 // pred_region
      %555 = dma.done [#allocation5], 8192
    $region21: #{tpu_custom_call.1} parent=1 // pred_fallthru
      _
    %556 = vsyncpa [#allocation4], 1
    %557 = vsyncpa [#allocation5], 1

</llo_original>
